<compile_context>
chip_gen: v7x
topology: tpu7x:2x2x1
jax: 0.10.0
libtpu: 0.0.40
codegen_flags: <defaults>
</compile_context>

<pallas_src>
import functools
import math

import jax
import jax.numpy as jnp
from jax.experimental import pallas as pl
from jax.experimental.pallas import tpu as pltpu

_LANES = 128
_SUBLANES = 8


def _pos_enc_kernel(inv_freq_ref, base_ref, out_ref, *, positions_per_row):
    """out[r, c] = sin(position(r, c) * inv_freq[c] + phase[c]).

    position(r, c) = r * positions_per_row + (c // d_model); the column-only
    part (c // d_model) * inv_freq[c] + phase[c] is prefolded into base_ref,
    so per element: 1 mul + 1 add (VPU) + 1 sin (EUP) + 1 store.
    """
    tile_rows = out_ref.shape[0]
    r0 = pl.program_id(0) * tile_rows
    rows = r0 + jax.lax.broadcasted_iota(jnp.int32, (tile_rows, 1), 0)
    row_pos = (rows * positions_per_row).astype(jnp.float32)   # (tile_rows, 1)
    angle = row_pos * inv_freq_ref[...] + base_ref[...]        # (tile_rows, C)
    out_ref[...] = jnp.sin(angle)


def positional_encoder(d_model: int, max_sequence_len: int,
                       *, tile_rows=None) -> jax.Array:
    """Returns the [max_sequence_len, d_model] positional-encoding table."""
    assert d_model % 2 == 0, "d_model must be even (sin/cos pairs)"
    total = max_sequence_len * d_model

    # Pick the kernel-side layout (n_rows, ccols).  ccols must be a multiple of
    # d_model (so the intra-row position is c // d_model) and ideally a
    # multiple of 128 (lane-dense, unmasked vst).  Row-major flat order equals
    # that of (max_sequence_len, d_model), so the final reshape is free-ish.
    lane_dense = math.lcm(d_model, _LANES)
    if total % lane_dense == 0:
        ccols = lane_dense
    else:
        # TODO(synk): pad the column axis to a multiple of 128 (and slice in
        # the wrapper) to avoid masked partial stores for this shape class.
        ccols = d_model
    positions_per_row = ccols // d_model
    n_rows = total // ccols

    # Column-only invariants, computed once outside the grid.
    c = jnp.arange(ccols, dtype=jnp.int32)
    j = c % d_model                                              # embedding col
    pair = (j // 2).astype(jnp.float32)                          # k in 10000^(2k/D)
    inv_freq = 1.0 / jnp.power(jnp.float32(10000.0), (2.0 * pair) / d_model)
    phase = jnp.where(j % 2 == 0, 0.0, jnp.float32(math.pi / 2.0))  # cos=sin(+pi/2)
    pos_off = (c // d_model).astype(jnp.float32)                 # intra-row position
    base = (pos_off * inv_freq + phase).reshape(1, ccols).astype(jnp.float32)
    inv_freq = inv_freq.reshape(1, ccols).astype(jnp.float32)

    if tile_rows is None:
        # ~2 MiB per output block => ~4 MiB double-buffered; comfortably under
        # the 32 MiB scoped-VMEM default on all generations while large enough
        # to amortize per-grid-step overhead near the HBM-write roofline.
        target_bytes = 2 * 1024 * 1024
        cap = max(_SUBLANES, target_bytes // (ccols * 4))
        if n_rows <= cap:
            tile_rows = n_rows
        else:
            tile_rows = (cap // _SUBLANES) * _SUBLANES

    grid = (pl.cdiv(n_rows, tile_rows),)
    table = pl.pallas_call(
        functools.partial(_pos_enc_kernel, positions_per_row=positions_per_row),
        out_shape=jax.ShapeDtypeStruct((n_rows, ccols), jnp.float32),
        grid=grid,
        in_specs=[
            pl.BlockSpec((1, ccols), lambda i: (0, 0)),   # inv_freq (resident)
            pl.BlockSpec((1, ccols), lambda i: (0, 0)),   # base     (resident)
        ],
        out_specs=pl.BlockSpec((tile_rows, ccols), lambda i: (i, 0)),
        compiler_params=pltpu.CompilerParams(
            dimension_semantics=("parallel",)),
    )(inv_freq, base)
    return table.reshape(max_sequence_len, d_model)


def positional_encoder_ref(d_model: int, max_sequence_len: int) -> jax.Array:
    """Pure-JAX reference mirroring the PyTorch forward exactly."""
    eveni = jnp.arange(0, d_model, 2, dtype=jnp.float32)
    denominator = jnp.power(jnp.float32(10000.0), eveni / d_model)
    position = jnp.arange(max_sequence_len, dtype=jnp.float32).reshape(
        max_sequence_len, 1)
    even_pe = jnp.sin(position / denominator)
    odd_pe = jnp.cos(position / denominator)
    embedding = jnp.stack([even_pe, odd_pe], axis=2)
    return embedding.reshape(max_sequence_len, d_model)


if __name__ == "__main__":
    _ = jax.random.PRNGKey(0)  # forward() consumes no tensor inputs; key unused.

    # 1) Spec-ish shape: d_model=32, max_len=8 -> folded lane-dense layout (2, 128).
    d_model, max_len = 32, 8
    out = jax.block_until_ready(positional_encoder(d_model, max_len))
    ref = positional_encoder_ref(d_model, max_len)
    assert out.shape == (max_len, d_model) and out.dtype == jnp.float32
    assert jnp.allclose(out, ref, atol=1e-5, rtol=1e-5)

    # 2) Lane-dense direct layout with a multi-step parallel grid.
    d_model2, max_len2 = 256, 64
    out2 = jax.block_until_ready(
        positional_encoder(d_model2, max_len2, tile_rows=16))
    ref2 = positional_encoder_ref(d_model2, max_len2)
    assert jnp.allclose(out2, ref2, atol=1e-5, rtol=1e-5)

    # 3) lcm-folded layout (d_model=48 -> ccols=384, 8 positions per row).
    d_model3, max_len3 = 48, 8
    out3 = jax.block_until_ready(positional_encoder(d_model3, max_len3))
    ref3 = positional_encoder_ref(d_model3, max_len3)
    assert jnp.allclose(out3, ref3, atol=1e-5, rtol=1e-5)

    # 4) Fallback path (total not divisible by lcm(d_model, 128)) stays correct.
    d_model4, max_len4 = 48, 5
    out4 = jax.block_until_ready(positional_encoder(d_model4, max_len4))
    ref4 = positional_encoder_ref(d_model4, max_len4)
    assert jnp.allclose(out4, ref4, atol=1e-5, rtol=1e-5)

    print("KERNEL_OK")
</pallas_src>

<mosaic_0001>
module attributes {stable_mosaic.version = 11 : i64} {
  func.func @_pos_enc_kernel(%arg0: i32, %arg1: memref<1x128xf32, #tpu.memory_space<vmem>>, %arg2: memref<1x128xf32, #tpu.memory_space<vmem>>, %arg3: memref<2x128xf32, #tpu.memory_space<vmem>>) attributes {dimension_semantics = [#tpu.dimension_semantics<parallel>], iteration_bounds = array<i64: 1>, scalar_prefetch = 0 : i64, scratch_operands = 0 : i64, tpu.core_type = #tpu.core_type<tc>, window_params = [{pipeline_mode = #tpu.pipeline_mode<synchronous>, transform_indices = @transform_0, window_bounds = array<i64: 1, 128>}, {pipeline_mode = #tpu.pipeline_mode<synchronous>, transform_indices = @transform_1, window_bounds = array<i64: 1, 128>}, {transform_indices = @transform_2, window_bounds = array<i64: 2, 128>}]} {
    %c2_i32 = arith.constant 2 : i32
    %0 = arith.muli %arg0, %c2_i32 : i32
    %1 = tpu.iota {dimensions = array<i32: 0>} : vector<2x1xi32>
    %2 = vector.broadcast %0 : i32 to vector<2x1xi32>
    %3 = arith.addi %2, %1 : vector<2x1xi32>
    %c4_i32 = arith.constant 4 : i32
    %4 = vector.broadcast %c4_i32 : i32 to vector<2x1xi32>
    %5 = arith.muli %3, %4 : vector<2x1xi32>
    %6 = arith.sitofp %5 : vector<2x1xi32> to vector<2x1xf32>
    %c0 = arith.constant 0 : index
    %c0_0 = arith.constant 0 : index
    %7 = vector.load %arg1[%c0, %c0_0] : memref<1x128xf32, #tpu.memory_space<vmem>>, vector<1x128xf32>
    %8 = vector.broadcast %6 : vector<2x1xf32> to vector<2x128xf32>
    %9 = vector.broadcast %7 : vector<1x128xf32> to vector<2x128xf32>
    %10 = arith.mulf %8, %9 : vector<2x128xf32>
    %c0_1 = arith.constant 0 : index
    %c0_2 = arith.constant 0 : index
    %11 = vector.load %arg2[%c0_1, %c0_2] : memref<1x128xf32, #tpu.memory_space<vmem>>, vector<1x128xf32>
    %12 = vector.broadcast %11 : vector<1x128xf32> to vector<2x128xf32>
    %13 = arith.addf %10, %12 : vector<2x128xf32>
    %14 = math.sin %13 : vector<2x128xf32>
    %c0_3 = arith.constant 0 : index
    %c0_4 = arith.constant 0 : index
    %15 = vector.load %arg3[%c0_3, %c0_4] : memref<2x128xf32, #tpu.memory_space<vmem>>, vector<2x128xf32>
    tpu.vector_store %arg3[%c0_3, %c0_4], %14 {strides = array<i32>} : memref<2x128xf32, #tpu.memory_space<vmem>>, vector<2x128xf32>,
    return
  }
  func.func @transform_0(%arg0: i32) -> (i32, i32) {
    %c0_i32 = arith.constant 0 : i32
    %c0_i32_0 = arith.constant 0 : i32
    %c0_i32_1 = arith.constant 0 : i32
    return %c0_i32, %c0_i32_0 : i32, i32
  }
  func.func @transform_1(%arg0: i32) -> (i32, i32) {
    %c0_i32 = arith.constant 0 : i32
    %c0_i32_0 = arith.constant 0 : i32
    %c0_i32_1 = arith.constant 0 : i32
    return %c0_i32, %c0_i32_0 : i32, i32
  }
  func.func @transform_2(%arg0: i32) -> (i32, i32) {
    %c0_i32 = arith.constant 0 : i32
    %c0_i32_0 = arith.constant 0 : i32
    return %arg0, %c0_i32 : i32, i32
  }
}

</mosaic_0001>

<llo_original>
// kernel: tpu_custom_call.1
$region0: #{tpu_custom_call.1}
  #allocation0 [shape = 'u32[]', space=smem, size = 0x4, offset = 0x4, fixed_abs, tag = 'smem constant byte address 0x4 - core index']
  #allocation1 [shape = 'u32[144,128]{1,0:T(1,128)}', space=vmem, size = 0x12000, scoped, tag = 'internal scratch']
  %s0 = inlined_call_operand.hbm [shape: f32[1,128], index: 0, kind: input, shape index: {}]
  %s1 = inlined_call_operand.vmem [shape: f32[1,128], index: 1, kind: input, shape index: {}]
  %s2 = inlined_call_operand.hbm [shape: f32[2,128], index: 2, kind: output, shape index: {}]
  %s3 = sld [smem:[#allocation0]]
  $region22: #{tpu_custom_call.1} parent=0
    _
  %s5 = ssub.s32 1, %s3
  %s6 = scalar_select 0, %s5, %s3
  $region1: #{tpu_custom_call.1} parent=0
    #allocation2 [shape = 'u8[512]{0}', space=vmem, size = 0x400, scoped, tag = 'input window, operand 0, single buffered']
    #allocation3 [shape = 's32[1]{0}', space=sflag, size = 0x4, scoped, tag = 'scoped memory for tpu_custom_call.1']
    #allocation4 [shape = 's32[1]{0}', space=sflag, size = 0x4, scoped, tag = 'scoped memory for tpu_custom_call.1']
    #allocation5 [shape = 'u8[1024]{0}', space=vmem, size = 0x400, scoped, tag = 'output window, operand 0, single buffered']
    %7 = vsyncpa [#allocation3], 0
    %8 = vsyncpa [#allocation4], 0
    // Predicated region
    $region2: #{tpu_custom_call.1} parent=1 // pred_check
      _
    $region3: #{tpu_custom_call.1} parent=1 // pred_check_branch
      %10 = sbr.rel (0) target = $region5
    $region4: #{tpu_custom_call.1} parent=1 // pred_region
      %s12 = ssub.s32 16, 16
      %13 = vsyncadd [#allocation3], %s12
      %s15 = sshll.u32 [#allocation2], 4
      %s16 = int_to_ptr.vmem [resolvable:$true] %s15
      %18 = dma.hbm_to_vmem [thread:$0]  %s0, 16, %s16, [#allocation3]
    $region5: #{tpu_custom_call.1} parent=1 // pred_fallthru
      _
    // Predicated region
    $region6: #{tpu_custom_call.1} parent=1 // pred_check
      _
    $region7: #{tpu_custom_call.1} parent=1 // pred_check_branch
      %20 = sbr.rel (0) target = $region9
    $region8: #{tpu_custom_call.1} parent=1 // pred_region
      _
    $region9: #{tpu_custom_call.1} parent=1 // pred_fallthru
      _
    // Predicated region
    $region10: #{tpu_custom_call.1} parent=1 // pred_check
      _
    $region11: #{tpu_custom_call.1} parent=1 // pred_check_branch
      %22 = sbr.rel (0) target = $region13
    $region12: #{tpu_custom_call.1} parent=1 // pred_region
      %23 = dma.done [#allocation3], 16
    $region13: #{tpu_custom_call.1} parent=1 // pred_fallthru
      _
    %s24 = smul.u32 0, 2
    %v25 = vlaneseq
    %v26 = vshrl.u32 %v25, 7
    %v27 = vstv %s24
    %v28 = vadd.s32 %v27, %v26
    %v29 = vmul.u32 %v28, 4
    %v30 = vcvt.s32.f32 %v29
    %v31 = vld [vmem:[#allocation2] sm:$0x1]
    %v33 = vlaneseq
    %v34 = vshrl.u32 %v33, 7
    %v35 = vsub.s32 0, %v34
    %v36 = vrot.slane %v31, %v35
    %v38 = vmul.f32 %v30, %v36
    %v39 = vld [vmem:[%s1] sm:$0x1]
    %v41 = vlaneseq
    %v42 = vshrl.u32 %v41, 7
    %v43 = vsub.s32 0, %v42
    %v44 = vrot.slane %v39, %v43
    %v46 = vadd.f32 %v38, %v44
    %v47 = vand.u32 2147483647, %v46
    %vm48 = vcmp.le.f32.partialorder %v47, 0.7853982
    %vm49 = vcmp.lt.s32.totalorder %v46, 0
    %v50 = vand.u32 %v46, 2139095040
    %v51 = vshrl.u32 %v50, 23
    %v52 = vsub.s32 %v51, 127
    %v53 = vand.u32 2147483647, %v46
    %v54 = vand.u32 %v53, 8388607
    %v55 = vor.u32 %v54, 8388608
    %v56 = vsub.s32 0, %v55
    %v57 = vadd.s32 %v52, 1
    %vm58 = vcmp.gt.s32.totalorder %v57, 0
    %v59 = vsel %vm58, %v57, 0
    %v60 = vshrl.u32 %v59, 5
    %v61 = vand.u32 %v59, 31
    %v62 = vsub.s32 32, %v61
    %v63 = vshrl.u32 683565275, %v62
    %v64 = vshll.u32 683565275, %v61
    %v65 = vshrl.u32 2475754826, %v62
    %v66 = vor.u32 %v64, %v65
    %v67 = vshll.u32 2475754826, %v61
    %v68 = vshrl.u32 2131351028, %v62
    %v69 = vor.u32 %v67, %v68
    %v70 = vshll.u32 2131351028, %v61
    %v71 = vshrl.u32 2102212464, %v62
    %v72 = vor.u32 %v70, %v71
    %v73 = vshll.u32 2102212464, %v61
    %v74 = vshrl.u32 920167782, %v62
    %v75 = vor.u32 %v73, %v74
    %v76 = vshll.u32 920167782, %v61
    %v77 = vshrl.u32 1326507024, %v62
    %v78 = vor.u32 %v76, %v77
    %vm79 = vcmp.lt.s32.totalorder %v60, 1
    %vm80 = vcmp.lt.s32.totalorder %v60, 2
    %vm81 = vcmp.lt.s32.totalorder %v60, 3
    %vm82 = vcmp.lt.s32.totalorder %v60, 4
    %v83 = vsel %vm79, %v63, %v66
    %v84 = vsel %vm82, %v72, 2102212464
    %v85 = vsel %vm81, %v69, %v84
    %v86 = vsel %vm80, %v83, %v85
    %v87 = vsel %vm79, %v66, %v69
    %v88 = vsel %vm82, %v75, 920167782
    %v89 = vsel %vm81, %v72, %v88
    %v90 = vsel %vm80, %v87, %v89
    %v91 = vsel %vm79, %v69, %v72
    %v92 = vsel %vm82, %v78, 1326507024
    %v93 = vsel %vm81, %v75, %v92
    %v94 = vsel %vm80, %v91, %v93
    %v95 = vshll.u32 %v55, 8
    %v96 = vmul.u32.u64.compose %v95, %v94
    %v97 = vextract.low.u32 %v96
    %v98 = vextract.high.u32 %v96
    %v99 = vmul.u32.u64.compose %v95, %v90
    %v100 = vextract.low.u32 %v99
    %v101 = vextract.high.u32 %v99
    %v102 = vmul.u32 %v95, %v86
    %v103 = vadd.s32 %v98, %v100
    %vm104 = vc.u32 %v98, %v100
    %v105 = vadd.s32 %v101, 1
    %v106 = vsel %vm104, %v105, %v101
    %v107 = vadd.s32 %v102, %v106
    %v108 = vadd.s32 %v107, 536870912
    %v109 = vshrl.u32 %v108, 30
    %v110 = vshll.u32 %v109, 30
    %v111 = vsub.s32 %v107, %v110
    %vm112 = vcmp.lt.s32.totalorder %v111, 0
    %v113 = vsub.s32 0, %v111
    %v114 = vsel %vm112, %v113, %v111
    %v115 = vclz %v114
    %v116 = vsub.s32 %v115, 2
    %vm117 = vcmp.gt.s32.totalorder 0, %v116
    %v118 = vsel %vm117, 0, %v116
    %v119 = vsub.s32 32, %v118
    %v120 = vshll.u32 %v111, %v118
    %v121 = vshrl.u32 %v103, %v119
    %v122 = vor.u32 %v120, %v121
    %v123 = vsub.s32 4294967266, %v118
    %v124 = vadd.s32 %v123, 127
    %v125 = vshll.u32 %v124, 23
    %v126 = vor.u32 4788187, %v125
    %v127 = vand.u32 2147483647, %v126
    %v129 = vcvt.s32.f32 %v122
    %v130 = vmul.f32 %v129, %v127
    %v131 = vxor.u32 %v130, 2147483648
    %v132 = vsel %vm49, %v131, %v130
    %v133 = vsub.s32 4, %v109
    %v134 = vsel %vm49, %v133, %v109
    %v135 = vsel %vm48, %v46, %v132
    %v136 = vsel %vm48, 0, %v134
    %v137 = vcosq.f32.pop %v135
    %v138 = vsinq.f32.pop %v135
    %vm139 = vweird.f32 %v46
    %v140 = vadd.s32 %v136, 3
    %v141 = vand.u32 %v140, 3
    %vm142 = vcmp.lt.s32.totalorder %v141, 2
    %vm143 = vcmp.eq.s32.totalorder %v141, 0
    %v144 = vxor.u32 %v138, 2147483648
    %v145 = vsel %vm143, %v137, %v144
    %vm146 = vcmp.eq.s32.totalorder %v141, 2
    %v147 = vxor.u32 %v137, 2147483648
    %v148 = vsel %vm146, %v147, %v138
    %v149 = vsel %vm142, %v145, %v148
    %v150 = vsel %vm139, nan, %v149
    %151 = vst [vmem:[#allocation5] sm:$0x3] %v150
    // Predicated region
    $region14: #{tpu_custom_call.1} parent=1 // pred_check
      _
    $region15: #{tpu_custom_call.1} parent=1 // pred_check_branch
      %153 = sbr.rel (0) target = $region17
    $region16: #{tpu_custom_call.1} parent=1 // pred_region
      %s155 = ssub.s32 32, 32
      %156 = vsyncadd [#allocation4], %s155
      %s158 = sshll.u32 [#allocation5], 4
      %s159 = int_to_ptr.vmem [resolvable:$true] %s158
      %161 = dma.vmem_to_hbm [thread:$0]  %s159, 32, %s2, [#allocation4]
    $region17: #{tpu_custom_call.1} parent=1 // pred_fallthru
      _
    // Predicated region
    $region18: #{tpu_custom_call.1} parent=1 // pred_check
      _
    $region19: #{tpu_custom_call.1} parent=1 // pred_check_branch
      %163 = sbr.rel (0) target = $region21
    $region20: #{tpu_custom_call.1} parent=1 // pred_region
      %164 = dma.done [#allocation4], 32
    $region21: #{tpu_custom_call.1} parent=1 // pred_fallthru
      _
    %165 = vsyncpa [#allocation3], 1
    %166 = vsyncpa [#allocation4], 1

</llo_original>
